<compile_context>
chip_gen: v6e
topology: v6e:2x2x1
jax: 0.10.0
libtpu: 0.0.40
codegen_flags: <defaults>
</compile_context>

<pallas_src>
import jax
import jax.numpy as jnp
from jax.experimental import pallas as pl
from jax.experimental.pallas import tpu as pltpu

LANE = 128  # vreg lane width: feature dims are padded to a multiple of this
# NOTE(v6e): if real D / D_r land between 128 and 256, padding to 256 fills the
# 256-wide MXU arrays at no extra cost; 128 is already a perfect fit on v5e.


def _round_up(v, m):
    return ((v + m - 1) // m) * m


# ----------------------------------------------------------------------------
# Kernels
# ----------------------------------------------------------------------------
def _apply_blocks_chunked(ys, w_in_ref, b_in_ref, w_out_ref):
    """Statically-unrolled B blocks over a list of independent row sub-chunks."""
    n_blocks = w_in_ref.shape[0]
    for i in range(n_blocks):
        w_in_i = w_in_ref[i]          # [D_pad,  D_r_pad] bf16 (VMEM resident)
        b_i = b_in_ref[i]             # [1,      D_r_pad] f32
        w_out_i = w_out_ref[i]        # [D_r_pad, D_pad ] bf16
        hs = [jnp.dot(y.astype(jnp.bfloat16), w_in_i,
                      preferred_element_type=jnp.float32) for y in ys]
        hs = [jnp.tanh(h + b_i) for h in hs]              # f32 bias + tanh (EUP)
        ys = [jnp.dot(h.astype(jnp.bfloat16), w_out_i,
                      preferred_element_type=jnp.float32) for h in hs]
    return ys


def _rfm_resident_kernel(x_ref, w_in_ref, b_in_ref, w_out_ref, o_ref):
    """All B blocks, all weights resident in VMEM, one row tile per grid step.

    x_ref:     [TILE_N, D_pad]      bf16
    w_in_ref:  [B, D_pad, D_r_pad]  bf16 (resident, constant index_map)
    b_in_ref:  [B, 1, D_r_pad]      f32
    w_out_ref: [B, D_r_pad, D_pad]  bf16
    o_ref:     [TILE_N, D_pad]      bf16
    """
    rows = x_ref.shape[0]
    # Split the row tile into independent sub-chunks so one chunk's tanh (EUP)
    # overlaps another chunk's matmul (MXU).  Chunks stay multiples of 16.
    if rows % 64 == 0:
        n_chunks = 4
    elif rows % 32 == 0:
        n_chunks = 2
    else:
        n_chunks = 1
    chunk = rows // n_chunks

    ys = [x_ref[pl.ds(c * chunk, chunk), :] for c in range(n_chunks)]
    ys = _apply_blocks_chunked(ys, w_in_ref, b_in_ref, w_out_ref)
    for c in range(n_chunks):
        o_ref[pl.ds(c * chunk, chunk), :] = ys[c].astype(o_ref.dtype)


def _rfm_blockgrid_kernel(x_ref, w_in_ref, b_in_ref, w_out_ref, o_ref, y_ref):
    """Fallback when the full weight stack does not fit VMEM: B on the grid
    ("arbitrary" axis), running activation carried in f32 VMEM scratch.

    w_in_ref:  [1, D_pad, D_r_pad]  (block b of the stack)
    y_ref:     [TILE_N, D_pad] f32 scratch (persists across grid steps)
    """
    b = pl.program_id(1)

    @pl.when(b == 0)
    def _():
        y_ref[...] = x_ref[...].astype(jnp.float32)

    h = jnp.dot(y_ref[...].astype(jnp.bfloat16), w_in_ref[0],
                preferred_element_type=jnp.float32)
    h = jnp.tanh(h + b_in_ref[0])
    y = jnp.dot(h.astype(jnp.bfloat16), w_out_ref[0],
                preferred_element_type=jnp.float32)
    y_ref[...] = y

    @pl.when(b == pl.num_programs(1) - 1)
    def _():
        o_ref[...] = y.astype(o_ref.dtype)


# ----------------------------------------------------------------------------
# Wrapper
# ----------------------------------------------------------------------------
def prepare_simple_rfm_params(w_in, b_in, w_out, *, lane=LANE):
    """Pad feature dims to the 128-lane width and cast weights to bf16.

    Call ONCE at parameter-init time (not per forward call): zero padding is
    mathematically exact and the padded columns of the output are identically
    unused after the wrapper's D-slice.
    """
    B, D, D_r = w_in.shape
    D_pad = _round_up(D, lane)
    D_r_pad = _round_up(D_r, lane)
    w_in_p = jnp.pad(w_in, ((0, 0), (0, D_pad - D), (0, D_r_pad - D_r))).astype(jnp.bfloat16)
    b_in_p = jnp.pad(b_in, ((0, 0), (0, 0), (0, D_r_pad - D_r))).astype(jnp.float32)
    w_out_p = jnp.pad(w_out, ((0, 0), (0, D_r_pad - D_r), (0, D_pad - D))).astype(jnp.bfloat16)
    return w_in_p, b_in_p, w_out_p


def simple_rfm_forward(x, w_in_p, b_in_p, w_out_p, *, tile_n=512,
                       vmem_budget_bytes=48 * 2**20):
    """x: [N, D] (any float dtype).  Padded/cast params from prepare_simple_rfm_params."""
    N, D = x.shape
    B, D_pad, D_r_pad = w_in_p.shape
    assert w_out_p.shape == (B, D_r_pad, D_pad) and b_in_p.shape == (B, 1, D_r_pad)

    # Stream activations in bf16 (they hit the MXU as bf16 anyway); only the
    # lane-dim padding of x is materialized, and only if D is not 128-aligned.
    x_in = x.astype(jnp.bfloat16)
    if D_pad != D:
        x_in = jnp.pad(x_in, ((0, 0), (0, D_pad - D)))

    # Row tile: multiple of 16 (bf16 vreg packing); cap at ceil(N/2) so the
    # parallel row axis has >=2 steps for v7x's two TCs; ragged last tile is
    # fine (rows are independent; OOB writes are dropped).
    if N <= 16:
        tile_rows = N
    else:
        tile_rows = min(_round_up(tile_n, 16), _round_up(pl.cdiv(N, 2), 16))
    grid_rows = pl.cdiv(N, tile_rows)

    # VMEM accounting (pipeline double-buffers every operand).
    weight_bytes = int(w_in_p.size * 2 + w_out_p.size * 2 + b_in_p.size * 4)
    tile_io_bytes = 2 * tile_rows * D_pad * 2              # x tile + out tile, bf16
    resident_need = 2 * weight_bytes + 2 * tile_io_bytes
    use_resident = resident_need <= vmem_budget_bytes
    if use_resident:
        vmem_need = resident_need
    else:
        per_block_bytes = weight_bytes // B
        vmem_need = 2 * per_block_bytes + 2 * tile_io_bytes + tile_rows * D_pad * 4

    vmem_limit_bytes = None
    if vmem_need > 24 * 2**20:   # only override the (small) default scoped limit when needed
        vmem_limit_bytes = int(min(vmem_need * 1.25 + (2 << 20), 96 * 2**20))

    cost = pl.CostEstimate(
        flops=4 * B * N * D_pad * D_r_pad,
        transcendentals=B * N * D_r_pad,
        bytes_accessed=int(x_in.size * 2 + weight_bytes + N * D_pad * 2),
    )
    out_shape = jax.ShapeDtypeStruct((N, D_pad), jnp.bfloat16)

    if use_resident:
        out = pl.pallas_call(
            _rfm_resident_kernel,
            out_shape=out_shape,
            grid_spec=pltpu.PrefetchScalarGridSpec(
                num_scalar_prefetch=0,
                grid=(grid_rows,),
                in_specs=[
                    pl.BlockSpec((tile_rows, D_pad), lambda n: (n, 0)),          # x tile
                    pl.BlockSpec((B, D_pad, D_r_pad), lambda n: (0, 0, 0)),      # W_in (resident)
                    pl.BlockSpec((B, 1, D_r_pad), lambda n: (0, 0, 0)),          # b_in (resident)
                    pl.BlockSpec((B, D_r_pad, D_pad), lambda n: (0, 0, 0)),      # W_out (resident)
                ],
                out_specs=pl.BlockSpec((tile_rows, D_pad), lambda n: (n, 0)),
            ),
            compiler_params=pltpu.CompilerParams(
                dimension_semantics=("parallel",),
                vmem_limit_bytes=vmem_limit_bytes,
            ),
            cost_estimate=cost,
        )(x_in, w_in_p, b_in_p, w_out_p)
    else:
        # Weight stack too big to keep resident: put B on the grid (reduction
        # axis last), carry the activation in an f32 VMEM scratch.
        out = pl.pallas_call(
            _rfm_blockgrid_kernel,
            out_shape=out_shape,
            grid_spec=pltpu.PrefetchScalarGridSpec(
                num_scalar_prefetch=0,
                grid=(grid_rows, B),
                in_specs=[
                    pl.BlockSpec((tile_rows, D_pad), lambda n, b: (n, 0)),
                    pl.BlockSpec((1, D_pad, D_r_pad), lambda n, b: (b, 0, 0)),
                    pl.BlockSpec((1, 1, D_r_pad), lambda n, b: (b, 0, 0)),
                    pl.BlockSpec((1, D_r_pad, D_pad), lambda n, b: (b, 0, 0)),
                ],
                out_specs=pl.BlockSpec((tile_rows, D_pad), lambda n, b: (n, 0)),
                scratch_shapes=[pltpu.VMEM((tile_rows, D_pad), jnp.float32)],
            ),
            compiler_params=pltpu.CompilerParams(
                dimension_semantics=("parallel", "arbitrary"),
                vmem_limit_bytes=vmem_limit_bytes,
            ),
            cost_estimate=cost,
        )(x_in, w_in_p, b_in_p, w_out_p)

    out = out[:, :D] if D != D_pad else out
    return out.astype(x.dtype)   # keep module semantics (same dtype out as in)


def _reference(x, w_in, b_in, w_out):
    y = x + 0.0
    for i in range(w_in.shape[0]):
        y = jnp.tanh(y @ w_in[i] + b_in[i]) @ w_out[i]
    return y


if __name__ == "__main__":
    # Small shapes consistent with the module: D=32 features, D_r=64 hidden, B=3 blocks.
    N, D, D_r, B = 8, 32, 64, 3

    key = jax.random.PRNGKey(0)
    kx, kwi, kbi, kwo = jax.random.split(key, 4)

    x = jax.random.normal(kx, (N, D), dtype=jnp.float32)
    # Deterministic synthetic parameters (stand-in for nn.Linear init).
    w_in = jax.random.normal(kwi, (B, D, D_r), dtype=jnp.float32) * (1.0 / jnp.sqrt(D))
    b_in = jax.random.normal(kbi, (B, 1, D_r), dtype=jnp.float32) * 0.01
    w_out = jax.random.normal(kwo, (B, D_r, D), dtype=jnp.float32) * (1.0 / jnp.sqrt(D_r))

    # Pad + cast weights ONCE (parameter-init time), then run the forward pass.
    params = prepare_simple_rfm_params(w_in, b_in, w_out)
    out = simple_rfm_forward(x, *params)
    out = jax.block_until_ready(out)

    ref = _reference(x, w_in, b_in, w_out)
    assert out.shape == (N, D)
    assert out.dtype == x.dtype
    # bf16 matmul operands / bf16 activation streaming with f32 accumulation.
    assert jnp.allclose(out, ref, atol=7e-2, rtol=7e-2), "mismatch vs JAX reference"

    print("KERNEL_OK")
</pallas_src>

<mosaic_0001>
module attributes {stable_mosaic.version = 11 : i64} {
  func.func @_rfm_resident_kernel(%arg0: i32, %arg1: memref<8x128xbf16, #tpu.memory_space<vmem>>, %arg2: memref<3x128x128xbf16, #tpu.memory_space<vmem>>, %arg3: memref<3x1x128xf32, #tpu.memory_space<vmem>>, %arg4: memref<3x128x128xbf16, #tpu.memory_space<vmem>>, %arg5: memref<8x128xbf16, #tpu.memory_space<vmem>>) attributes {dimension_semantics = [#tpu.dimension_semantics<parallel>], iteration_bounds = array<i64: 1>, scalar_prefetch = 0 : i64, scratch_operands = 0 : i64, tpu.core_type = #tpu.core_type<tc>, window_params = [{transform_indices = @transform_0, window_bounds = array<i64: 8, 128>}, {pipeline_mode = #tpu.pipeline_mode<synchronous>, transform_indices = @transform_1, window_bounds = array<i64: 3, 128, 128>}, {pipeline_mode = #tpu.pipeline_mode<synchronous>, transform_indices = @transform_2, window_bounds = array<i64: 3, 1, 128>}, {pipeline_mode = #tpu.pipeline_mode<synchronous>, transform_indices = @transform_3, window_bounds = array<i64: 3, 128, 128>}, {transform_indices = @transform_4, window_bounds = array<i64: 8, 128>}]} {
    %c0 = arith.constant 0 : index
    %c0_0 = arith.constant 0 : index
    %0 = vector.load %arg1[%c0, %c0_0] : memref<8x128xbf16, #tpu.memory_space<vmem>>, vector<8x128xbf16>
    %c0_1 = arith.constant 0 : index
    %c0_2 = arith.constant 0 : index
    %c0_3 = arith.constant 0 : index
    %1 = vector.load %arg2[%c0_1, %c0_2, %c0_3] : memref<3x128x128xbf16, #tpu.memory_space<vmem>>, vector<1x128x128xbf16>
    %2 = vector.shape_cast %1 : vector<1x128x128xbf16> to vector<128x128xbf16>
    %c0_4 = arith.constant 0 : index
    %c0_5 = arith.constant 0 : index
    %c0_6 = arith.constant 0 : index
    %3 = vector.load %arg3[%c0_4, %c0_5, %c0_6] : memref<3x1x128xf32, #tpu.memory_space<vmem>>, vector<1x1x128xf32>
    %4 = vector.shape_cast %3 : vector<1x1x128xf32> to vector<1x128xf32>
    %c0_7 = arith.constant 0 : index
    %c0_8 = arith.constant 0 : index
    %c0_9 = arith.constant 0 : index
    %5 = vector.load %arg4[%c0_7, %c0_8, %c0_9] : memref<3x128x128xbf16, #tpu.memory_space<vmem>>, vector<1x128x128xbf16>
    %6 = vector.shape_cast %5 : vector<1x128x128xbf16> to vector<128x128xbf16>
    %cst = arith.constant dense<0.000000e+00> : vector<8x128xf32>
    %7 = tpu.matmul %0, %2, %cst {dimension_numbers = #tpu.dot_dimension_numbers<[1], [0], [0], [1], [0, 0, 1, 1], [], []>} : vector<8x128xbf16>, vector<128x128xbf16>, vector<8x128xf32> -> vector<8x128xf32>
    %8 = vector.broadcast %4 : vector<1x128xf32> to vector<8x128xf32>
    %9 = arith.addf %7, %8 : vector<8x128xf32>
    %10 = math.tanh %9 : vector<8x128xf32>
    %11 = arith.truncf %10 : vector<8x128xf32> to vector<8x128xbf16>
    %cst_10 = arith.constant dense<0.000000e+00> : vector<8x128xf32>
    %12 = tpu.matmul %11, %6, %cst_10 {dimension_numbers = #tpu.dot_dimension_numbers<[1], [0], [0], [1], [0, 0, 1, 1], [], []>} : vector<8x128xbf16>, vector<128x128xbf16>, vector<8x128xf32> -> vector<8x128xf32>
    %c1 = arith.constant 1 : index
    %c0_11 = arith.constant 0 : index
    %c0_12 = arith.constant 0 : index
    %13 = vector.load %arg2[%c1, %c0_11, %c0_12] : memref<3x128x128xbf16, #tpu.memory_space<vmem>>, vector<1x128x128xbf16>
    %14 = vector.shape_cast %13 : vector<1x128x128xbf16> to vector<128x128xbf16>
    %c1_13 = arith.constant 1 : index
    %c0_14 = arith.constant 0 : index
    %c0_15 = arith.constant 0 : index
    %15 = vector.load %arg3[%c1_13, %c0_14, %c0_15] : memref<3x1x128xf32, #tpu.memory_space<vmem>>, vector<1x1x128xf32>
    %16 = vector.shape_cast %15 : vector<1x1x128xf32> to vector<1x128xf32>
    %c1_16 = arith.constant 1 : index
    %c0_17 = arith.constant 0 : index
    %c0_18 = arith.constant 0 : index
    %17 = vector.load %arg4[%c1_16, %c0_17, %c0_18] : memref<3x128x128xbf16, #tpu.memory_space<vmem>>, vector<1x128x128xbf16>
    %18 = vector.shape_cast %17 : vector<1x128x128xbf16> to vector<128x128xbf16>
    %19 = arith.truncf %12 : vector<8x128xf32> to vector<8x128xbf16>
    %cst_19 = arith.constant dense<0.000000e+00> : vector<8x128xf32>
    %20 = tpu.matmul %19, %14, %cst_19 {dimension_numbers = #tpu.dot_dimension_numbers<[1], [0], [0], [1], [0, 0, 1, 1], [], []>} : vector<8x128xbf16>, vector<128x128xbf16>, vector<8x128xf32> -> vector<8x128xf32>
    %21 = vector.broadcast %16 : vector<1x128xf32> to vector<8x128xf32>
    %22 = arith.addf %20, %21 : vector<8x128xf32>
    %23 = math.tanh %22 : vector<8x128xf32>
    %24 = arith.truncf %23 : vector<8x128xf32> to vector<8x128xbf16>
    %cst_20 = arith.constant dense<0.000000e+00> : vector<8x128xf32>
    %25 = tpu.matmul %24, %18, %cst_20 {dimension_numbers = #tpu.dot_dimension_numbers<[1], [0], [0], [1], [0, 0, 1, 1], [], []>} : vector<8x128xbf16>, vector<128x128xbf16>, vector<8x128xf32> -> vector<8x128xf32>
    %c2 = arith.constant 2 : index
    %c0_21 = arith.constant 0 : index
    %c0_22 = arith.constant 0 : index
    %26 = vector.load %arg2[%c2, %c0_21, %c0_22] : memref<3x128x128xbf16, #tpu.memory_space<vmem>>, vector<1x128x128xbf16>
    %27 = vector.shape_cast %26 : vector<1x128x128xbf16> to vector<128x128xbf16>
    %c2_23 = arith.constant 2 : index
    %c0_24 = arith.constant 0 : index
    %c0_25 = arith.constant 0 : index
    %28 = vector.load %arg3[%c2_23, %c0_24, %c0_25] : memref<3x1x128xf32, #tpu.memory_space<vmem>>, vector<1x1x128xf32>
    %29 = vector.shape_cast %28 : vector<1x1x128xf32> to vector<1x128xf32>
    %c2_26 = arith.constant 2 : index
    %c0_27 = arith.constant 0 : index
    %c0_28 = arith.constant 0 : index
    %30 = vector.load %arg4[%c2_26, %c0_27, %c0_28] : memref<3x128x128xbf16, #tpu.memory_space<vmem>>, vector<1x128x128xbf16>
    %31 = vector.shape_cast %30 : vector<1x128x128xbf16> to vector<128x128xbf16>
    %32 = arith.truncf %25 : vector<8x128xf32> to vector<8x128xbf16>
    %cst_29 = arith.constant dense<0.000000e+00> : vector<8x128xf32>
    %33 = tpu.matmul %32, %27, %cst_29 {dimension_numbers = #tpu.dot_dimension_numbers<[1], [0], [0], [1], [0, 0, 1, 1], [], []>} : vector<8x128xbf16>, vector<128x128xbf16>, vector<8x128xf32> -> vector<8x128xf32>
    %34 = vector.broadcast %29 : vector<1x128xf32> to vector<8x128xf32>
    %35 = arith.addf %33, %34 : vector<8x128xf32>
    %36 = math.tanh %35 : vector<8x128xf32>
    %37 = arith.truncf %36 : vector<8x128xf32> to vector<8x128xbf16>
    %cst_30 = arith.constant dense<0.000000e+00> : vector<8x128xf32>
    %38 = tpu.matmul %37, %31, %cst_30 {dimension_numbers = #tpu.dot_dimension_numbers<[1], [0], [0], [1], [0, 0, 1, 1], [], []>} : vector<8x128xbf16>, vector<128x128xbf16>, vector<8x128xf32> -> vector<8x128xf32>
    %39 = arith.truncf %38 : vector<8x128xf32> to vector<8x128xbf16>
    %c0_31 = arith.constant 0 : index
    %c0_32 = arith.constant 0 : index
    %40 = vector.load %arg5[%c0_31, %c0_32] : memref<8x128xbf16, #tpu.memory_space<vmem>>, vector<8x128xbf16>
    tpu.vector_store %arg5[%c0_31, %c0_32], %39 {strides = array<i32>} : memref<8x128xbf16, #tpu.memory_space<vmem>>, vector<8x128xbf16>,
    return
  }
  func.func @transform_0(%arg0: i32) -> (i32, i32) {
    %c0_i32 = arith.constant 0 : i32
    %c0_i32_0 = arith.constant 0 : i32
    return %arg0, %c0_i32 : i32, i32
  }
  func.func @transform_1(%arg0: i32) -> (i32, i32, i32) {
    %c0_i32 = arith.constant 0 : i32
    %c0_i32_0 = arith.constant 0 : i32
    %c0_i32_1 = arith.constant 0 : i32
    %c0_i32_2 = arith.constant 0 : i32
    return %c0_i32, %c0_i32_0, %c0_i32_1 : i32, i32, i32
  }
  func.func @transform_2(%arg0: i32) -> (i32, i32, i32) {
    %c0_i32 = arith.constant 0 : i32
    %c0_i32_0 = arith.constant 0 : i32
    %c0_i32_1 = arith.constant 0 : i32
    %c0_i32_2 = arith.constant 0 : i32
    return %c0_i32, %c0_i32_0, %c0_i32_1 : i32, i32, i32
  }
  func.func @transform_3(%arg0: i32) -> (i32, i32, i32) {
    %c0_i32 = arith.constant 0 : i32
    %c0_i32_0 = arith.constant 0 : i32
    %c0_i32_1 = arith.constant 0 : i32
    %c0_i32_2 = arith.constant 0 : i32
    return %c0_i32, %c0_i32_0, %c0_i32_1 : i32, i32, i32
  }
  func.func @transform_4(%arg0: i32) -> (i32, i32) {
    %c0_i32 = arith.constant 0 : i32
    %c0_i32_0 = arith.constant 0 : i32
    return %arg0, %c0_i32 : i32, i32
  }
}

</mosaic_0001>

<llo_original>
// kernel: tpu_custom_call.1
$region0: #{tpu_custom_call.1}
  #allocation0 [shape = 'u32[]', space=smem, size = 0x4, offset = 0x4, fixed_abs, tag = 'smem constant byte address 0x4 - core index']
  #allocation1 [shape = 'u32[144,128]{1,0:T(1,128)}', space=vmem, size = 0x12000, scoped, tag = 'internal scratch']
  %s0 = inlined_call_operand.hbm [shape: bf16[8,128], index: 0, kind: input, shape index: {}]
  %s1 = inlined_call_operand.hbm [shape: bf16[3,128,128], index: 1, kind: input, shape index: {}]
  %s2 = inlined_call_operand.vmem [shape: f32[3,1,128], index: 2, kind: input, shape index: {}]
  %s3 = inlined_call_operand.hbm [shape: bf16[3,128,128], index: 3, kind: input, shape index: {}]
  %s4 = inlined_call_operand.hbm [shape: bf16[8,128], index: 4, kind: output, shape index: {}]
  %s5 = sld [smem:[#allocation0]]
  $region38: #{tpu_custom_call.1} parent=0
    _
  %s7 = ssub.s32 1, %s5
  %s8 = scalar_select 0, %s7, %s5
  $region1: #{tpu_custom_call.1} parent=0
    #allocation2 [shape = 'u8[2048]{0}', space=vmem, size = 0x800, scoped, tag = 'input window, operand 0, single buffered']
    #allocation3 [shape = 's32[1]{0}', space=sflag, size = 0x4, scoped, tag = 'scoped memory for tpu_custom_call.1']
    #allocation4 [shape = 's32[1]{0}', space=sflag, size = 0x4, scoped, tag = 'scoped memory for tpu_custom_call.1']
    #allocation5 [shape = 'u8[98304]{0}', space=vmem, size = 0x18000, scoped, tag = 'input window, operand 1, single buffered']
    #allocation6 [shape = 's32[1]{0}', space=sflag, size = 0x4, scoped, tag = 'scoped memory for tpu_custom_call.1']
    #allocation7 [shape = 'u8[98304]{0}', space=vmem, size = 0x18000, scoped, tag = 'input window, operand 3, single buffered']
    #allocation8 [shape = 'u8[2048]{0}', space=vmem, size = 0x800, scoped, tag = 'output window, operand 0, single buffered']
    %9 = vsyncpa [#allocation3], 0
    %10 = vsyncpa [#allocation6], 0
    %11 = vsyncpa [#allocation4], 0
    // Predicated region
    $region2: #{tpu_custom_call.1} parent=1 // pred_check
      _
    $region3: #{tpu_custom_call.1} parent=1 // pred_check_branch
      %13 = sbr.rel (0) target = $region5
    $region4: #{tpu_custom_call.1} parent=1 // pred_region
      %s15 = ssub.s32 64, 64
      %16 = vsyncadd [#allocation3], %s15
      %s18 = sshll.u32 [#allocation2], 4
      %s19 = int_to_ptr.vmem [resolvable:$true] %s18
      %21 = dma.hbm_to_vmem [thread:$0]  %s0, 64, %s19, [#allocation3]
    $region5: #{tpu_custom_call.1} parent=1 // pred_fallthru
      _
    // Predicated region
    $region6: #{tpu_custom_call.1} parent=1 // pred_check
      _
    $region7: #{tpu_custom_call.1} parent=1 // pred_check_branch
      %23 = sbr.rel (0) target = $region9
    $region8: #{tpu_custom_call.1} parent=1 // pred_region
      %s25 = ssub.s32 3072, 3072
      %26 = vsyncadd [#allocation6], %s25
      %s27 = sshll.u32 [#allocation5], 4
      %s28 = int_to_ptr.vmem [resolvable:$true] %s27
      %33 = dma.hbm_to_vmem [thread:$0]  %s1, 3072, %s28, [#allocation6], 64, 64, 4
    $region9: #{tpu_custom_call.1} parent=1 // pred_fallthru
      _
    // Predicated region
    $region10: #{tpu_custom_call.1} parent=1 // pred_check
      _
    $region11: #{tpu_custom_call.1} parent=1 // pred_check_branch
      %35 = sbr.rel (0) target = $region13
    $region12: #{tpu_custom_call.1} parent=1 // pred_region
      _
    $region13: #{tpu_custom_call.1} parent=1 // pred_fallthru
      _
    // Predicated region
    $region14: #{tpu_custom_call.1} parent=1 // pred_check
      _
    $region15: #{tpu_custom_call.1} parent=1 // pred_check_branch
      %37 = sbr.rel (0) target = $region17
    $region16: #{tpu_custom_call.1} parent=1 // pred_region
      %s39 = ssub.s32 3072, 3072
      %40 = vsyncadd [#allocation6], %s39
      %s41 = sshll.u32 [#allocation7], 4
      %s42 = int_to_ptr.vmem [resolvable:$true] %s41
      %47 = dma.hbm_to_vmem [thread:$0]  %s3, 3072, %s42, [#allocation6], 64, 64, 4
    $region17: #{tpu_custom_call.1} parent=1 // pred_fallthru
      _
    // Predicated region
    $region18: #{tpu_custom_call.1} parent=1 // pred_check
      _
    $region19: #{tpu_custom_call.1} parent=1 // pred_check_branch
      %49 = sbr.rel (0) target = $region21
    $region20: #{tpu_custom_call.1} parent=1 // pred_region
      %50 = dma.done [#allocation3], 64
    $region21: #{tpu_custom_call.1} parent=1 // pred_fallthru
      _
    // Predicated region
    $region22: #{tpu_custom_call.1} parent=1 // pred_check
      _
    $region23: #{tpu_custom_call.1} parent=1 // pred_check_branch
      %52 = sbr.rel (0) target = $region25
    $region24: #{tpu_custom_call.1} parent=1 // pred_region
      %53 = dma.done [#allocation6], 3072
    $region25: #{tpu_custom_call.1} parent=1 // pred_fallthru
      _
    // Predicated region
    $region26: #{tpu_custom_call.1} parent=1 // pred_check
      _
    $region27: #{tpu_custom_call.1} parent=1 // pred_check_branch
      %55 = sbr.rel (0) target = $region29
    $region28: #{tpu_custom_call.1} parent=1 // pred_region
      %56 = dma.done [#allocation6], 3072
    $region29: #{tpu_custom_call.1} parent=1 // pred_fallthru
      _
    %v58 = vld [vmem:[#allocation2] sm:$0xf]
    %v59 = vld [vmem:[#allocation5] sm:$0xf]
    %v60 = vld [vmem:[#allocation5 + $0x4] sm:$0xf]
    %v61 = vld [vmem:[#allocation5 + $0x8] sm:$0xf]
    %v62 = vld [vmem:[#allocation5 + $0xc] sm:$0xf]
    %v63 = vld [vmem:[#allocation5 + $0x10] sm:$0xf]
    %v64 = vld [vmem:[#allocation5 + $0x14] sm:$0xf]
    %v65 = vld [vmem:[#allocation5 + $0x18] sm:$0xf]
    %v66 = vld [vmem:[#allocation5 + $0x1c] sm:$0xf]
    %v67 = vld [vmem:[#allocation5 + $0x20] sm:$0xf]
    %v68 = vld [vmem:[#allocation5 + $0x24] sm:$0xf]
    %v69 = vld [vmem:[#allocation5 + $0x28] sm:$0xf]
    %v70 = vld [vmem:[#allocation5 + $0x2c] sm:$0xf]
    %v71 = vld [vmem:[#allocation5 + $0x30] sm:$0xf]
    %v72 = vld [vmem:[#allocation5 + $0x34] sm:$0xf]
    %v73 = vld [vmem:[#allocation5 + $0x38] sm:$0xf]
    %v74 = vld [vmem:[#allocation5 + $0x3c] sm:$0xf]
    %v75 = vld [vmem:[%s2] sm:$0x1]
    %v76 = vld [vmem:[#allocation7] sm:$0xf]
    %v77 = vld [vmem:[#allocation7 + $0x4] sm:$0xf]
    %v78 = vld [vmem:[#allocation7 + $0x8] sm:$0xf]
    %v79 = vld [vmem:[#allocation7 + $0xc] sm:$0xf]
    %v80 = vld [vmem:[#allocation7 + $0x10] sm:$0xf]
    %v81 = vld [vmem:[#allocation7 + $0x14] sm:$0xf]
    %v82 = vld [vmem:[#allocation7 + $0x18] sm:$0xf]
    %v83 = vld [vmem:[#allocation7 + $0x1c] sm:$0xf]
    %v84 = vld [vmem:[#allocation7 + $0x20] sm:$0xf]
    %v85 = vld [vmem:[#allocation7 + $0x24] sm:$0xf]
    %v86 = vld [vmem:[#allocation7 + $0x28] sm:$0xf]
    %v87 = vld [vmem:[#allocation7 + $0x2c] sm:$0xf]
    %v88 = vld [vmem:[#allocation7 + $0x30] sm:$0xf]
    %v89 = vld [vmem:[#allocation7 + $0x34] sm:$0xf]
    %v90 = vld [vmem:[#allocation7 + $0x38] sm:$0xf]
    %v91 = vld [vmem:[#allocation7 + $0x3c] sm:$0xf]
    %v93 = vlaneseq
    %v94 = vshrl.u32 %v93, 7
    %v95 = vsub.s32 0, %v94
    %v96 = vrot.slane %v75, %v95
    %v114 = vunpack.c.l.b16 %v59
    %v115 = vunpack.c.l.b16 %v60
    %v116 = vunpack.c.l.b16 %v61
    %v117 = vunpack.c.l.b16 %v62
    %v118 = vunpack.c.l.b16 %v63
    %v119 = vunpack.c.l.b16 %v64
    %v120 = vunpack.c.l.b16 %v65
    %v121 = vunpack.c.l.b16 %v66
    %v122 = vunpack.c.l.b16 %v67
    %v123 = vunpack.c.l.b16 %v68
    %v124 = vunpack.c.l.b16 %v69
    %v125 = vunpack.c.l.b16 %v70
    %v126 = vunpack.c.l.b16 %v71
    %v127 = vunpack.c.l.b16 %v72
    %v128 = vunpack.c.l.b16 %v73
    %v129 = vunpack.c.l.b16 %v74
    %v130 = vpack.c.b16 %v115, %v114
    %v131 = vpack.c.b16 %v117, %v116
    %v132 = vpack.c.b16 %v119, %v118
    %v133 = vpack.c.b16 %v121, %v120
    %v134 = vpack.c.b16 %v123, %v122
    %v135 = vpack.c.b16 %v125, %v124
    %v136 = vpack.c.b16 %v127, %v126
    %v137 = vpack.c.b16 %v129, %v128
    %146 = vmatprep.subr.bf16.mxu0 0
    %147 = vmatpush1.bf16.msra.mxu0 %v137
    %148 = vmatprep.subr.bf16.mxu0 0
    %149 = vmatpush1.bf16.msra.mxu0 %v136
    %150 = vmatprep.subr.bf16.mxu0 0
    %151 = vmatpush1.bf16.msra.mxu0 %v135
    %152 = vmatprep.subr.bf16.mxu0 0
    %153 = vmatpush1.bf16.msra.mxu0 %v134
    %154 = vmatprep.subr.bf16.mxu0 0
    %155 = vmatpush1.bf16.msra.mxu0 %v133
    %156 = vmatprep.subr.bf16.mxu0 0
    %157 = vmatpush1.bf16.msra.mxu0 %v132
    %158 = vmatprep.subr.bf16.mxu0 0
    %159 = vmatpush1.bf16.msra.mxu0 %v131
    %160 = vmatprep.subr.bf16.mxu0 0
    %161 = vmatpush1.bf16.msra.mxu0 %v130
    %162 = vmatprep.subr.bf16.mxu0 0
    %163 = vmatpush2.bf16.msra.mxu0 0
    %164 = vmatprep.subr.bf16.mxu0 0
    %165 = vmatpush2.bf16.msra.mxu0 0
    %166 = vmatprep.subr.bf16.mxu0 0
    %167 = vmatpush2.bf16.msra.mxu0 0
    %168 = vmatprep.subr.bf16.mxu0 0
    %169 = vmatpush2.bf16.msra.mxu0 0
    %170 = vmatprep.subr.bf16.mxu0 0
    %171 = vmatpush2.bf16.msra.mxu0 0
    %172 = vmatprep.subr.bf16.mxu0 0
    %173 = vmatpush2.bf16.msra.mxu0 0
    %174 = vmatprep.subr.bf16.mxu0 0
    %175 = vmatpush2.bf16.msra.mxu0 0
    %176 = vmatprep.subr.bf16.mxu0 0
    %177 = vmatpush2.bf16.msra.mxu0 0
    %178 = vmatprep.mubr.bf16.mxu0 0
    %179 = vmatmul.mubr.bf16.gmra.mxu0 %v58
    %v180 = vpop.f32.mrf.mxu0
    %v181 = vadd.f32 %v96, %v180
    %v182 = vpop.f32.mrf.mxu0
    %v183 = vpop.f32.mrf.mxu0
    %v184 = vpop.f32.mrf.mxu0
    %185 = vdwg.mxu0
    %v186 = vtanh.pop %v181
    %v187 = vpack.c.bf16 %v186, %v186
    %v204 = vunpack.c.l.b16 %v76
    %v205 = vunpack.c.l.b16 %v77
    %v206 = vunpack.c.l.b16 %v78
    %v207 = vunpack.c.l.b16 %v79
    %v208 = vunpack.c.l.b16 %v80
    %v209 = vunpack.c.l.b16 %v81
    %v210 = vunpack.c.l.b16 %v82
    %v211 = vunpack.c.l.b16 %v83
    %v212 = vunpack.c.l.b16 %v84
    %v213 = vunpack.c.l.b16 %v85
    %v214 = vunpack.c.l.b16 %v86
    %v215 = vunpack.c.l.b16 %v87
    %v216 = vunpack.c.l.b16 %v88
    %v217 = vunpack.c.l.b16 %v89
    %v218 = vunpack.c.l.b16 %v90
    %v219 = vunpack.c.l.b16 %v91
    %v220 = vpack.c.b16 %v205, %v204
    %v221 = vpack.c.b16 %v207, %v206
    %v222 = vpack.c.b16 %v209, %v208
    %v223 = vpack.c.b16 %v211, %v210
    %v224 = vpack.c.b16 %v213, %v212
    %v225 = vpack.c.b16 %v215, %v214
    %v226 = vpack.c.b16 %v217, %v216
    %v227 = vpack.c.b16 %v219, %v218
    %236 = vmatprep.subr.bf16.mxu0 0
    %237 = vmatpush1.bf16.msra.mxu0 %v227
    %238 = vmatprep.subr.bf16.mxu0 0
    %239 = vmatpush1.bf16.msra.mxu0 %v226
    %240 = vmatprep.subr.bf16.mxu0 0
    %241 = vmatpush1.bf16.msra.mxu0 %v225
    %242 = vmatprep.subr.bf16.mxu0 0
    %243 = vmatpush1.bf16.msra.mxu0 %v224
    %244 = vmatprep.subr.bf16.mxu0 0
    %245 = vmatpush1.bf16.msra.mxu0 %v223
    %246 = vmatprep.subr.bf16.mxu0 0
    %247 = vmatpush1.bf16.msra.mxu0 %v222
    %248 = vmatprep.subr.bf16.mxu0 0
    %249 = vmatpush1.bf16.msra.mxu0 %v221
    %250 = vmatprep.subr.bf16.mxu0 0
    %251 = vmatpush1.bf16.msra.mxu0 %v220
    %252 = vmatprep.subr.bf16.mxu0 0
    %253 = vmatpush2.bf16.msra.mxu0 0
    %254 = vmatprep.subr.bf16.mxu0 0
    %255 = vmatpush2.bf16.msra.mxu0 0
    %256 = vmatprep.subr.bf16.mxu0 0
    %257 = vmatpush2.bf16.msra.mxu0 0
    %258 = vmatprep.subr.bf16.mxu0 0
    %259 = vmatpush2.bf16.msra.mxu0 0
    %260 = vmatprep.subr.bf16.mxu0 0
    %261 = vmatpush2.bf16.msra.mxu0 0
    %262 = vmatprep.subr.bf16.mxu0 0
    %263 = vmatpush2.bf16.msra.mxu0 0
    %264 = vmatprep.subr.bf16.mxu0 0
    %265 = vmatpush2.bf16.msra.mxu0 0
    %266 = vmatprep.subr.bf16.mxu0 0
    %267 = vmatpush2.bf16.msra.mxu0 0
    %268 = vmatprep.mubr.bf16.mxu0 0
    %269 = vmatmul.mubr.bf16.gmra.mxu0 %v187
    %v270 = vpop.f32.mrf.mxu0
    %v271 = vadd.f32 0.0, %v270
    %v272 = vpop.f32.mrf.mxu0
    %v273 = vpop.f32.mrf.mxu0
    %v274 = vpop.f32.mrf.mxu0
    %275 = vdwg.mxu0
    %s276 = scalar_lea.vmem [#allocation5], 64
    %v277 = vld [vmem:[%s276] sm:$0xf]
    %v278 = vld [vmem:[%s276 + $0x4] sm:$0xf]
    %v279 = vld [vmem:[%s276 + $0x8] sm:$0xf]
    %v280 = vld [vmem:[%s276 + $0xc] sm:$0xf]
    %v281 = vld [vmem:[%s276 + $0x10] sm:$0xf]
    %v282 = vld [vmem:[%s276 + $0x14] sm:$0xf]
    %v283 = vld [vmem:[%s276 + $0x18] sm:$0xf]
    %v284 = vld [vmem:[%s276 + $0x1c] sm:$0xf]
    %v285 = vld [vmem:[%s276 + $0x20] sm:$0xf]
    %v286 = vld [vmem:[%s276 + $0x24] sm:$0xf]
    %v287 = vld [vmem:[%s276 + $0x28] sm:$0xf]
    %v288 = vld [vmem:[%s276 + $0x2c] sm:$0xf]
    %v289 = vld [vmem:[%s276 + $0x30] sm:$0xf]
    %v290 = vld [vmem:[%s276 + $0x34] sm:$0xf]
    %v291 = vld [vmem:[%s276 + $0x38] sm:$0xf]
    %v292 = vld [vmem:[%s276 + $0x3c] sm:$0xf]
    %s293 = scalar_lea.vmem %s2, 1
    %v294 = vld [vmem:[%s293] sm:$0x1]
    %s295 = scalar_lea.vmem [#allocation7], 64
    %v296 = vld [vmem:[%s295] sm:$0xf]
    %v297 = vld [vmem:[%s295 + $0x4] sm:$0xf]
    %v298 = vld [vmem:[%s295 + $0x8] sm:$0xf]
    %v299 = vld [vmem:[%s295 + $0xc] sm:$0xf]
    %v300 = vld [vmem:[%s295 + $0x10] sm:$0xf]
    %v301 = vld [vmem:[%s295 + $0x14] sm:$0xf]
    %v302 = vld [vmem:[%s295 + $0x18] sm:$0xf]
    %v303 = vld [vmem:[%s295 + $0x1c] sm:$0xf]
    %v304 = vld [vmem:[%s295 + $0x20] sm:$0xf]
    %v305 = vld [vmem:[%s295 + $0x24] sm:$0xf]
    %v306 = vld [vmem:[%s295 + $0x28] sm:$0xf]
    %v307 = vld [vmem:[%s295 + $0x2c] sm:$0xf]
    %v308 = vld [vmem:[%s295 + $0x30] sm:$0xf]
    %v309 = vld [vmem:[%s295 + $0x34] sm:$0xf]
    %v310 = vld [vmem:[%s295 + $0x38] sm:$0xf]
    %v311 = vld [vmem:[%s295 + $0x3c] sm:$0xf]
    %v312 = vpack.c.bf16 %v271, %v271
    %v314 = vlaneseq
    %v315 = vshrl.u32 %v314, 7
    %v316 = vsub.s32 0, %v315
    %v317 = vrot.slane %v294, %v316
    %v335 = vunpack.c.l.b16 %v277
    %v336 = vunpack.c.l.b16 %v278
    %v337 = vunpack.c.l.b16 %v279
    %v338 = vunpack.c.l.b16 %v280
    %v339 = vunpack.c.l.b16 %v281
    %v340 = vunpack.c.l.b16 %v282
    %v341 = vunpack.c.l.b16 %v283
    %v342 = vunpack.c.l.b16 %v284
    %v343 = vunpack.c.l.b16 %v285
    %v344 = vunpack.c.l.b16 %v286
    %v345 = vunpack.c.l.b16 %v287
    %v346 = vunpack.c.l.b16 %v288
    %v347 = vunpack.c.l.b16 %v289
    %v348 = vunpack.c.l.b16 %v290
    %v349 = vunpack.c.l.b16 %v291
    %v350 = vunpack.c.l.b16 %v292
    %v351 = vpack.c.b16 %v336, %v335
    %v352 = vpack.c.b16 %v338, %v337
    %v353 = vpack.c.b16 %v340, %v339
    %v354 = vpack.c.b16 %v342, %v341
    %v355 = vpack.c.b16 %v344, %v343
    %v356 = vpack.c.b16 %v346, %v345
    %v357 = vpack.c.b16 %v348, %v347
    %v358 = vpack.c.b16 %v350, %v349
    %367 = vmatprep.subr.bf16.mxu0 0
    %368 = vmatpush1.bf16.msra.mxu0 %v358
    %369 = vmatprep.subr.bf16.mxu0 0
    %370 = vmatpush1.bf16.msra.mxu0 %v357
    %371 = vmatprep.subr.bf16.mxu0 0
    %372 = vmatpush1.bf16.msra.mxu0 %v356
    %373 = vmatprep.subr.bf16.mxu0 0
    %374 = vmatpush1.bf16.msra.mxu0 %v355
    %375 = vmatprep.subr.bf16.mxu0 0
    %376 = vmatpush1.bf16.msra.mxu0 %v354
    %377 = vmatprep.subr.bf16.mxu0 0
    %378 = vmatpush1.bf16.msra.mxu0 %v353
    %379 = vmatprep.subr.bf16.mxu0 0
    %380 = vmatpush1.bf16.msra.mxu0 %v352
    %381 = vmatprep.subr.bf16.mxu0 0
    %382 = vmatpush1.bf16.msra.mxu0 %v351
    %383 = vmatprep.subr.bf16.mxu0 0
    %384 = vmatpush2.bf16.msra.mxu0 0
    %385 = vmatprep.subr.bf16.mxu0 0
    %386 = vmatpush2.bf16.msra.mxu0 0
    %387 = vmatprep.subr.bf16.mxu0 0
    %388 = vmatpush2.bf16.msra.mxu0 0
    %389 = vmatprep.subr.bf16.mxu0 0
    %390 = vmatpush2.bf16.msra.mxu0 0
    %391 = vmatprep.subr.bf16.mxu0 0
    %392 = vmatpush2.bf16.msra.mxu0 0
    %393 = vmatprep.subr.bf16.mxu0 0
    %394 = vmatpush2.bf16.msra.mxu0 0
    %395 = vmatprep.subr.bf16.mxu0 0
    %396 = vmatpush2.bf16.msra.mxu0 0
    %397 = vmatprep.subr.bf16.mxu0 0
    %398 = vmatpush2.bf16.msra.mxu0 0
    %399 = vmatprep.mubr.bf16.mxu0 0
    %400 = vmatmul.mubr.bf16.gmra.mxu0 %v312
    %v401 = vpop.f32.mrf.mxu0
    %v402 = vadd.f32 %v317, %v401
    %v403 = vpop.f32.mrf.mxu0
    %v404 = vpop.f32.mrf.mxu0
    %v405 = vpop.f32.mrf.mxu0
    %406 = vdwg.mxu0
    %v407 = vtanh.pop %v402
    %v408 = vpack.c.bf16 %v407, %v407
    %v425 = vunpack.c.l.b16 %v296
    %v426 = vunpack.c.l.b16 %v297
    %v427 = vunpack.c.l.b16 %v298
    %v428 = vunpack.c.l.b16 %v299
    %v429 = vunpack.c.l.b16 %v300
    %v430 = vunpack.c.l.b16 %v301
    %v431 = vunpack.c.l.b16 %v302
    %v432 = vunpack.c.l.b16 %v303
    %v433 = vunpack.c.l.b16 %v304
    %v434 = vunpack.c.l.b16 %v305
    %v435 = vunpack.c.l.b16 %v306
    %v436 = vunpack.c.l.b16 %v307
    %v437 = vunpack.c.l.b16 %v308
    %v438 = vunpack.c.l.b16 %v309
    %v439 = vunpack.c.l.b16 %v310
    %v440 = vunpack.c.l.b16 %v311
    %v441 = vpack.c.b16 %v426, %v425
    %v442 = vpack.c.b16 %v428, %v427
    %v443 = vpack.c.b16 %v430, %v429
    %v444 = vpack.c.b16 %v432, %v431
    %v445 = vpack.c.b16 %v434, %v433
    %v446 = vpack.c.b16 %v436, %v435
    %v447 = vpack.c.b16 %v438, %v437
    %v448 = vpack.c.b16 %v440, %v439
    %457 = vmatprep.subr.bf16.mxu0 0
    %458 = vmatpush1.bf16.msra.mxu0 %v448
    %459 = vmatprep.subr.bf16.mxu0 0
    %460 = vmatpush1.bf16.msra.mxu0 %v447
    %461 = vmatprep.subr.bf16.mxu0 0
    %462 = vmatpush1.bf16.msra.mxu0 %v446
    %463 = vmatprep.subr.bf16.mxu0 0
    %464 = vmatpush1.bf16.msra.mxu0 %v445
    %465 = vmatprep.subr.bf16.mxu0 0
    %466 = vmatpush1.bf16.msra.mxu0 %v444
    %467 = vmatprep.subr.bf16.mxu0 0
    %468 = vmatpush1.bf16.msra.mxu0 %v443
    %469 = vmatprep.subr.bf16.mxu0 0
    %470 = vmatpush1.bf16.msra.mxu0 %v442
    %471 = vmatprep.subr.bf16.mxu0 0
    %472 = vmatpush1.bf16.msra.mxu0 %v441
    %473 = vmatprep.subr.bf16.mxu0 0
    %474 = vmatpush2.bf16.msra.mxu0 0
    %475 = vmatprep.subr.bf16.mxu0 0
    %476 = vmatpush2.bf16.msra.mxu0 0
    %477 = vmatprep.subr.bf16.mxu0 0
    %478 = vmatpush2.bf16.msra.mxu0 0
    %479 = vmatprep.subr.bf16.mxu0 0
    %480 = vmatpush2.bf16.msra.mxu0 0
    %481 = vmatprep.subr.bf16.mxu0 0
    %482 = vmatpush2.bf16.msra.mxu0 0
    %483 = vmatprep.subr.bf16.mxu0 0
    %484 = vmatpush2.bf16.msra.mxu0 0
    %485 = vmatprep.subr.bf16.mxu0 0
    %486 = vmatpush2.bf16.msra.mxu0 0
    %487 = vmatprep.subr.bf16.mxu0 0
    %488 = vmatpush2.bf16.msra.mxu0 0
    %489 = vmatprep.mubr.bf16.mxu0 0
    %490 = vmatmul.mubr.bf16.gmra.mxu0 %v408
    %v491 = vpop.f32.mrf.mxu0
    %v492 = vadd.f32 0.0, %v491
    %v493 = vpop.f32.mrf.mxu0
    %v494 = vpop.f32.mrf.mxu0
    %v495 = vpop.f32.mrf.mxu0
    %496 = vdwg.mxu0
    %s497 = scalar_lea.vmem [#allocation5], 128
    %v498 = vld [vmem:[%s497] sm:$0xf]
    %v499 = vld [vmem:[%s497 + $0x4] sm:$0xf]
    %v500 = vld [vmem:[%s497 + $0x8] sm:$0xf]
    %v501 = vld [vmem:[%s497 + $0xc] sm:$0xf]
    %v502 = vld [vmem:[%s497 + $0x10] sm:$0xf]
    %v503 = vld [vmem:[%s497 + $0x14] sm:$0xf]
    %v504 = vld [vmem:[%s497 + $0x18] sm:$0xf]
    %v505 = vld [vmem:[%s497 + $0x1c] sm:$0xf]
    %v506 = vld [vmem:[%s497 + $0x20] sm:$0xf]
    %v507 = vld [vmem:[%s497 + $0x24] sm:$0xf]
    %v508 = vld [vmem:[%s497 + $0x28] sm:$0xf]
    %v509 = vld [vmem:[%s497 + $0x2c] sm:$0xf]
    %v510 = vld [vmem:[%s497 + $0x30] sm:$0xf]
    %v511 = vld [vmem:[%s497 + $0x34] sm:$0xf]
    %v512 = vld [vmem:[%s497 + $0x38] sm:$0xf]
    %v513 = vld [vmem:[%s497 + $0x3c] sm:$0xf]
    %s514 = scalar_lea.vmem %s2, 2
    %v515 = vld [vmem:[%s514] sm:$0x1]
    %s516 = scalar_lea.vmem [#allocation7], 128
    %v517 = vld [vmem:[%s516] sm:$0xf]
    %v518 = vld [vmem:[%s516 + $0x4] sm:$0xf]
    %v519 = vld [vmem:[%s516 + $0x8] sm:$0xf]
    %v520 = vld [vmem:[%s516 + $0xc] sm:$0xf]
    %v521 = vld [vmem:[%s516 + $0x10] sm:$0xf]
    %v522 = vld [vmem:[%s516 + $0x14] sm:$0xf]
    %v523 = vld [vmem:[%s516 + $0x18] sm:$0xf]
    %v524 = vld [vmem:[%s516 + $0x1c] sm:$0xf]
    %v525 = vld [vmem:[%s516 + $0x20] sm:$0xf]
    %v526 = vld [vmem:[%s516 + $0x24] sm:$0xf]
    %v527 = vld [vmem:[%s516 + $0x28] sm:$0xf]
    %v528 = vld [vmem:[%s516 + $0x2c] sm:$0xf]
    %v529 = vld [vmem:[%s516 + $0x30] sm:$0xf]
    %v530 = vld [vmem:[%s516 + $0x34] sm:$0xf]
    %v531 = vld [vmem:[%s516 + $0x38] sm:$0xf]
    %v532 = vld [vmem:[%s516 + $0x3c] sm:$0xf]
    %v533 = vpack.c.bf16 %v492, %v492
    %v535 = vlaneseq
    %v536 = vshrl.u32 %v535, 7
    %v537 = vsub.s32 0, %v536
    %v538 = vrot.slane %v515, %v537
    %v556 = vunpack.c.l.b16 %v498
    %v557 = vunpack.c.l.b16 %v499
    %v558 = vunpack.c.l.b16 %v500
    %v559 = vunpack.c.l.b16 %v501
    %v560 = vunpack.c.l.b16 %v502
    %v561 = vunpack.c.l.b16 %v503
    %v562 = vunpack.c.l.b16 %v504
    %v563 = vunpack.c.l.b16 %v505
    %v564 = vunpack.c.l.b16 %v506
    %v565 = vunpack.c.l.b16 %v507
    %v566 = vunpack.c.l.b16 %v508
    %v567 = vunpack.c.l.b16 %v509
    %v568 = vunpack.c.l.b16 %v510
    %v569 = vunpack.c.l.b16 %v511
    %v570 = vunpack.c.l.b16 %v512
    %v571 = vunpack.c.l.b16 %v513
    %v572 = vpack.c.b16 %v557, %v556
    %v573 = vpack.c.b16 %v559, %v558
    %v574 = vpack.c.b16 %v561, %v560
    %v575 = vpack.c.b16 %v563, %v562
    %v576 = vpack.c.b16 %v565, %v564
    %v577 = vpack.c.b16 %v567, %v566
    %v578 = vpack.c.b16 %v569, %v568
    %v579 = vpack.c.b16 %v571, %v570
    %588 = vmatprep.subr.bf16.mxu0 0
    %589 = vmatpush1.bf16.msra.mxu0 %v579
    %590 = vmatprep.subr.bf16.mxu0 0
    %591 = vmatpush1.bf16.msra.mxu0 %v578
    %592 = vmatprep.subr.bf16.mxu0 0
    %593 = vmatpush1.bf16.msra.mxu0 %v577
    %594 = vmatprep.subr.bf16.mxu0 0
    %595 = vmatpush1.bf16.msra.mxu0 %v576
    %596 = vmatprep.subr.bf16.mxu0 0
    %597 = vmatpush1.bf16.msra.mxu0 %v575
    %598 = vmatprep.subr.bf16.mxu0 0
    %599 = vmatpush1.bf16.msra.mxu0 %v574
    %600 = vmatprep.subr.bf16.mxu0 0
    %601 = vmatpush1.bf16.msra.mxu0 %v573
    %602 = vmatprep.subr.bf16.mxu0 0
    %603 = vmatpush1.bf16.msra.mxu0 %v572
    %604 = vmatprep.subr.bf16.mxu0 0
    %605 = vmatpush2.bf16.msra.mxu0 0
    %606 = vmatprep.subr.bf16.mxu0 0
    %607 = vmatpush2.bf16.msra.mxu0 0
    %608 = vmatprep.subr.bf16.mxu0 0
    %609 = vmatpush2.bf16.msra.mxu0 0
    %610 = vmatprep.subr.bf16.mxu0 0
    %611 = vmatpush2.bf16.msra.mxu0 0
    %612 = vmatprep.subr.bf16.mxu0 0
    %613 = vmatpush2.bf16.msra.mxu0 0
    %614 = vmatprep.subr.bf16.mxu0 0
    %615 = vmatpush2.bf16.msra.mxu0 0
    %616 = vmatprep.subr.bf16.mxu0 0
    %617 = vmatpush2.bf16.msra.mxu0 0
    %618 = vmatprep.subr.bf16.mxu0 0
    %619 = vmatpush2.bf16.msra.mxu0 0
    %620 = vmatprep.mubr.bf16.mxu0 0
    %621 = vmatmul.mubr.bf16.gmra.mxu0 %v533
    %v622 = vpop.f32.mrf.mxu0
    %v623 = vadd.f32 %v538, %v622
    %v624 = vpop.f32.mrf.mxu0
    %v625 = vpop.f32.mrf.mxu0
    %v626 = vpop.f32.mrf.mxu0
    %627 = vdwg.mxu0
    %v628 = vtanh.pop %v623
    %v629 = vpack.c.bf16 %v628, %v628
    %v646 = vunpack.c.l.b16 %v517
    %v647 = vunpack.c.l.b16 %v518
    %v648 = vunpack.c.l.b16 %v519
    %v649 = vunpack.c.l.b16 %v520
    %v650 = vunpack.c.l.b16 %v521
    %v651 = vunpack.c.l.b16 %v522
    %v652 = vunpack.c.l.b16 %v523
    %v653 = vunpack.c.l.b16 %v524
    %v654 = vunpack.c.l.b16 %v525
    %v655 = vunpack.c.l.b16 %v526
    %v656 = vunpack.c.l.b16 %v527
    %v657 = vunpack.c.l.b16 %v528
    %v658 = vunpack.c.l.b16 %v529
    %v659 = vunpack.c.l.b16 %v530
    %v660 = vunpack.c.l.b16 %v531
    %v661 = vunpack.c.l.b16 %v532
    %v662 = vpack.c.b16 %v647, %v646
    %v663 = vpack.c.b16 %v649, %v648
    %v664 = vpack.c.b16 %v651, %v650
    %v665 = vpack.c.b16 %v653, %v652
    %v666 = vpack.c.b16 %v655, %v654
    %v667 = vpack.c.b16 %v657, %v656
    %v668 = vpack.c.b16 %v659, %v658
    %v669 = vpack.c.b16 %v661, %v660
    %678 = vmatprep.subr.bf16.mxu0 0
    %679 = vmatpush1.bf16.msra.mxu0 %v669
    %680 = vmatprep.subr.bf16.mxu0 0
    %681 = vmatpush1.bf16.msra.mxu0 %v668
    %682 = vmatprep.subr.bf16.mxu0 0
    %683 = vmatpush1.bf16.msra.mxu0 %v667
    %684 = vmatprep.subr.bf16.mxu0 0
    %685 = vmatpush1.bf16.msra.mxu0 %v666
    %686 = vmatprep.subr.bf16.mxu0 0
    %687 = vmatpush1.bf16.msra.mxu0 %v665
    %688 = vmatprep.subr.bf16.mxu0 0
    %689 = vmatpush1.bf16.msra.mxu0 %v664
    %690 = vmatprep.subr.bf16.mxu0 0
    %691 = vmatpush1.bf16.msra.mxu0 %v663
    %692 = vmatprep.subr.bf16.mxu0 0
    %693 = vmatpush1.bf16.msra.mxu0 %v662
    %694 = vmatprep.subr.bf16.mxu0 0
    %695 = vmatpush2.bf16.msra.mxu0 0
    %696 = vmatprep.subr.bf16.mxu0 0
    %697 = vmatpush2.bf16.msra.mxu0 0
    %698 = vmatprep.subr.bf16.mxu0 0
    %699 = vmatpush2.bf16.msra.mxu0 0
    %700 = vmatprep.subr.bf16.mxu0 0
    %701 = vmatpush2.bf16.msra.mxu0 0
    %702 = vmatprep.subr.bf16.mxu0 0
    %703 = vmatpush2.bf16.msra.mxu0 0
    %704 = vmatprep.subr.bf16.mxu0 0
    %705 = vmatpush2.bf16.msra.mxu0 0
    %706 = vmatprep.subr.bf16.mxu0 0
    %707 = vmatpush2.bf16.msra.mxu0 0
    %708 = vmatprep.subr.bf16.mxu0 0
    %709 = vmatpush2.bf16.msra.mxu0 0
    %710 = vmatprep.mubr.bf16.mxu0 0
    %711 = vmatmul.mubr.bf16.gmra.mxu0 %v629
    %v712 = vpop.f32.mrf.mxu0
    %v713 = vadd.f32 0.0, %v712
    %v714 = vpop.f32.mrf.mxu0
    %v715 = vpop.f32.mrf.mxu0
    %v716 = vpop.f32.mrf.mxu0
    %717 = vdwg.mxu0
    %v718 = vpack.c.bf16 %v713, %v713
    %719 = vst [vmem:[#allocation8] sm:$0xf] %v718
    // Predicated region
    $region30: #{tpu_custom_call.1} parent=1 // pred_check
      _
    $region31: #{tpu_custom_call.1} parent=1 // pred_check_branch
      %721 = sbr.rel (0) target = $region33
    $region32: #{tpu_custom_call.1} parent=1 // pred_region
      %s723 = ssub.s32 64, 64
      %724 = vsyncadd [#allocation4], %s723
      %s726 = sshll.u32 [#allocation8], 4
      %s727 = int_to_ptr.vmem [resolvable:$true] %s726
      %729 = dma.vmem_to_hbm [thread:$0]  %s727, 64, %s4, [#allocation4]
    $region33: #{tpu_custom_call.1} parent=1 // pred_fallthru
      _
    // Predicated region
    $region34: #{tpu_custom_call.1} parent=1 // pred_check
      _
    $region35: #{tpu_custom_call.1} parent=1 // pred_check_branch
      %731 = sbr.rel (0) target = $region37
    $region36: #{tpu_custom_call.1} parent=1 // pred_region
      %732 = dma.done [#allocation4], 64
    $region37: #{tpu_custom_call.1} parent=1 // pred_fallthru
      _
    %733 = vsyncpa [#allocation3], 1
    %734 = vsyncpa [#allocation6], 1
    %735 = vsyncpa [#allocation4], 1

</llo_original>
